<compile_context>
chip_gen: v5e
topology: v5e:2x2
jax: 0.10.0
libtpu: 0.0.40
codegen_flags: <defaults>
</compile_context>

<pallas_src>
import functools

import jax
import jax.numpy as jnp
from jax.experimental import pallas as pl
from jax.experimental.pallas import tpu as pltpu

LANES = 128
SUBLANES = 8
# Max rows of the (R, 128) f32 slab per grid step: 1024x128xf32 = 512 KiB.
# Fused kernel streams 5 slab tiles double-buffered (~5 MiB) -> fits default
# scoped VMEM on v5e (16 MiB), v6e (32 MiB), v7x (32 MiB scoped / 64 physical).
TILE_ROWS = 1024
# Leading "parallel" grid axis: shards rows across v7x's 2 TensorCores (each
# core owns its own partial-loss block).  Sequential loop on v5e/v6e.
NCORES = 2


def _round_up(x, m):
    return pl.cdiv(x, m) * m


def _plan_rows(rows):
    """(tile_rows, steps_per_core, padded_rows) for a given slab row count.

    Idempotent: _plan_rows(padded_rows) re-derives the same (tile_rows, steps),
    so flatten_params and the kernel wrappers always agree."""
    per_core = pl.cdiv(rows, NCORES)
    steps = max(1, pl.cdiv(per_core, TILE_ROWS))
    tile_rows = _round_up(pl.cdiv(per_core, steps), SUBLANES)
    padded = NCORES * steps * tile_rows
    return tile_rows, steps, padded


# ----------------------------- Pallas kernels ------------------------------

def _si_fused_kernel(w_ref, p_ref, prev_ref, omega_ref,
                     omega_out_ref, loss_ref, *, epsilon):
    """omega_new = omega + W/((p-prev)^2+eps); loss += omega_new*(p-prev)^2."""
    # TODO(synk): epsilon is baked in (static module attribute); pass it as an
    # SMEM scalar instead if it ever has to vary at runtime.
    d = p_ref[...] - prev_ref[...]
    d2 = d * d
    omega_new = omega_ref[...] + w_ref[...] / (d2 + epsilon)
    omega_out_ref[...] = omega_new

    # Per-core lane-dense partial-sum block, VMEM-resident across the inner
    # ("arbitrary") grid axis.
    @pl.when(pl.program_id(1) == 0)
    def _():
        loss_ref[...] = jnp.zeros_like(loss_ref)

    contrib = omega_new * d2                                        # (T, 128)
    # (T,128) -> (T//8, 8, 128); sum over axis 0 = pure VPU vreg adds (no XLU).
    loss_ref[...] += contrib.reshape(-1, SUBLANES, LANES).sum(axis=0)


def _surrogate_loss_kernel(p_ref, prev_ref, omega_ref, loss_ref):
    """loss += omega * (p - prev)^2 with fixed omega (training-loop path)."""
    @pl.when(pl.program_id(1) == 0)
    def _():
        loss_ref[...] = jnp.zeros_like(loss_ref)

    d = p_ref[...] - prev_ref[...]
    contrib = omega_ref[...] * d * d                                # (T, 128)
    loss_ref[...] += contrib.reshape(-1, SUBLANES, LANES).sum(axis=0)


# ------------------------------ JAX wrappers --------------------------------

def flatten_params(param_dict):
    """Flatten a dict of parameter arrays into one lane-dense (R, 128) slab."""
    flats = [jnp.ravel(v).astype(jnp.float32) for v in param_dict.values()]
    flat = jnp.concatenate(flats)
    n = flat.shape[0]
    n_pad = _round_up(n, LANES)
    flat = jnp.pad(flat, (0, n_pad - n))
    slab = flat.reshape(-1, LANES)
    _, _, padded = _plan_rows(slab.shape[0])
    if padded != slab.shape[0]:
        slab = jnp.pad(slab, ((0, padded - slab.shape[0]), (0, 0)))
    return slab


def _make_specs(rows):
    tile_rows, steps, padded = _plan_rows(rows)
    assert padded == rows, "slab must come from flatten_params (aligned rows)"
    slab_spec = pl.BlockSpec((tile_rows, LANES),
                             lambda c, i: (c * steps + i, 0))
    loss_spec = pl.BlockSpec((SUBLANES, LANES), lambda c, i: (c, 0))
    return slab_spec, loss_spec, steps


def update_omega_and_surrogate_loss(W_slab, p_slab, prev_slab, omega_slab,
                                    epsilon):
    """Fused SI update: returns (omega_new slab, surrogate loss w/ new omega)."""
    R = p_slab.shape[0]
    slab_spec, loss_spec, steps = _make_specs(R)

    omega_new, loss_part = pl.pallas_call(
        functools.partial(_si_fused_kernel, epsilon=epsilon),
        out_shape=(
            jax.ShapeDtypeStruct((R, LANES), jnp.float32),
            jax.ShapeDtypeStruct((NCORES * SUBLANES, LANES), jnp.float32),
        ),
        grid_spec=pltpu.PrefetchScalarGridSpec(
            num_scalar_prefetch=0,
            grid=(NCORES, steps),
            in_specs=[slab_spec, slab_spec, slab_spec, slab_spec],
            out_specs=(slab_spec, loss_spec),
        ),
        # omega_slab (input 3) is accumulated into in place -> no extra
        # omega-sized HBM buffer.
        input_output_aliases={3: 0},
        compiler_params=pltpu.CompilerParams(
            dimension_semantics=("parallel", "arbitrary")),
    )(W_slab, p_slab, prev_slab, omega_slab)
    return omega_new, jnp.sum(loss_part)


def surrogate_loss(p_slab, prev_slab, omega_slab):
    """Standalone SI surrogate loss (training-loop path, omega fixed)."""
    R = p_slab.shape[0]
    slab_spec, loss_spec, steps = _make_specs(R)

    loss_part = pl.pallas_call(
        _surrogate_loss_kernel,
        out_shape=jax.ShapeDtypeStruct((NCORES * SUBLANES, LANES), jnp.float32),
        grid_spec=pltpu.PrefetchScalarGridSpec(
            num_scalar_prefetch=0,
            grid=(NCORES, steps),
            in_specs=[slab_spec, slab_spec, slab_spec],
            out_specs=loss_spec,
        ),
        compiler_params=pltpu.CompilerParams(
            dimension_semantics=("parallel", "arbitrary")),
    )(p_slab, prev_slab, omega_slab)
    return jnp.sum(loss_part)


# --------------------------------- main -------------------------------------

if __name__ == "__main__":
    # TODO(synk): forward() is abstract in ContinualLearner; only the SI math
    # (update_omega / surrogate_loss) has concrete semantics to implement.

    key = jax.random.PRNGKey(0)
    k = jax.random.split(key, 12)

    # Deterministic synthetic "named parameters" of a small predictor.
    param_shapes = {
        "conv1__weight": (4, 4, 3, 3),   # out_ch, in_ch, kh, kw
        "conv1__bias":   (4,),
        "fc1__weight":   (32, 64),
        "fc1__bias":     (32,),
    }

    def make(shapes, keys):
        return {n: jax.random.normal(kk, s, dtype=jnp.float32)
                for (n, s), kk in zip(shapes.items(), keys)}

    params      = make(param_shapes, k[0:4])    # current p
    prev_params = make(param_shapes, k[4:8])    # {n}_SI_prev_task buffers
    W_contrib   = {n: jnp.abs(v) for n, v in make(param_shapes, k[8:12]).items()}
    omega_init  = {n: jnp.zeros(s, jnp.float32) for n, s in param_shapes.items()}

    epsilon = 0.1

    p_slab     = flatten_params(params)
    prev_slab  = flatten_params(prev_params)
    W_slab     = flatten_params(W_contrib)
    omega_slab = flatten_params(omega_init)

    # Plain-JAX reference (computed BEFORE the kernel call: omega_slab may be
    # updated in place via input_output_aliases).
    diff = p_slab - prev_slab
    omega_ref = omega_slab + W_slab / (diff * diff + epsilon)
    loss_ref = jnp.sum(omega_ref * diff * diff)
    omega_ref = jax.block_until_ready(omega_ref)
    loss_ref = jax.block_until_ready(loss_ref)

    # Fused kernel: update omega and compute the surrogate loss in one pass.
    omega_new, loss = update_omega_and_surrogate_loss(
        W_slab, p_slab, prev_slab, omega_slab, epsilon)
    omega_new = jax.block_until_ready(omega_new)
    loss = jax.block_until_ready(loss)

    # Standalone surrogate_loss (training-loop path) with the updated omega.
    loss_standalone = surrogate_loss(p_slab, prev_slab, omega_new)
    loss_standalone = jax.block_until_ready(loss_standalone)

    assert jnp.allclose(omega_new, omega_ref, rtol=1e-5, atol=1e-5)
    assert jnp.allclose(loss, loss_ref, rtol=1e-4, atol=1e-2)
    assert jnp.allclose(loss_standalone, loss_ref, rtol=1e-4, atol=1e-2)

    print("KERNEL_OK")
</pallas_src>

<mosaic_0001>
module attributes {stable_mosaic.version = 11 : i64} {
  func.func @_si_fused_kernel(%arg0: i32, %arg1: i32, %arg2: memref<16x128xf32, #tpu.memory_space<vmem>>, %arg3: memref<16x128xf32, #tpu.memory_space<vmem>>, %arg4: memref<16x128xf32, #tpu.memory_space<vmem>>, %arg5: memref<16x128xf32, #tpu.memory_space<vmem>>, %arg6: memref<16x128xf32, #tpu.memory_space<vmem>>, %arg7: memref<8x128xf32, #tpu.memory_space<vmem>>) attributes {dimension_semantics = [#tpu.dimension_semantics<parallel>, #tpu.dimension_semantics<arbitrary>], iteration_bounds = array<i64: 2, 1>, scalar_prefetch = 0 : i64, scratch_operands = 0 : i64, tpu.core_type = #tpu.core_type<tc>, window_params = [{transform_indices = @transform_0, window_bounds = array<i64: 16, 128>}, {transform_indices = @transform_1, window_bounds = array<i64: 16, 128>}, {transform_indices = @transform_2, window_bounds = array<i64: 16, 128>}, {transform_indices = @transform_3, window_bounds = array<i64: 16, 128>}, {transform_indices = @transform_4, window_bounds = array<i64: 16, 128>}, {transform_indices = @transform_5, window_bounds = array<i64: 8, 128>}]} {
    %c0 = arith.constant 0 : index
    %c0_0 = arith.constant 0 : index
    %0 = vector.load %arg3[%c0, %c0_0] : memref<16x128xf32, #tpu.memory_space<vmem>>, vector<16x128xf32>
    %c0_1 = arith.constant 0 : index
    %c0_2 = arith.constant 0 : index
    %1 = vector.load %arg4[%c0_1, %c0_2] : memref<16x128xf32, #tpu.memory_space<vmem>>, vector<16x128xf32>
    %2 = arith.subf %0, %1 : vector<16x128xf32>
    %3 = arith.mulf %2, %2 : vector<16x128xf32>
    %c0_3 = arith.constant 0 : index
    %c0_4 = arith.constant 0 : index
    %4 = vector.load %arg5[%c0_3, %c0_4] : memref<16x128xf32, #tpu.memory_space<vmem>>, vector<16x128xf32>
    %c0_5 = arith.constant 0 : index
    %c0_6 = arith.constant 0 : index
    %5 = vector.load %arg2[%c0_5, %c0_6] : memref<16x128xf32, #tpu.memory_space<vmem>>, vector<16x128xf32>
    %cst = arith.constant 1.000000e-01 : f32
    %6 = vector.broadcast %cst : f32 to vector<16x128xf32>
    %7 = arith.addf %3, %6 : vector<16x128xf32>
    %8 = arith.divf %5, %7 : vector<16x128xf32>
    %9 = arith.addf %4, %8 : vector<16x128xf32>
    %c0_7 = arith.constant 0 : index
    %c0_8 = arith.constant 0 : index
    %10 = vector.load %arg6[%c0_7, %c0_8] : memref<16x128xf32, #tpu.memory_space<vmem>>, vector<16x128xf32>
    tpu.vector_store %arg6[%c0_7, %c0_8], %9 {strides = array<i32>} : memref<16x128xf32, #tpu.memory_space<vmem>>, vector<16x128xf32>,
    %c0_i32 = arith.constant 0 : i32
    %11 = arith.cmpi eq, %arg1, %c0_i32 : i32
    %12 = arith.extui %11 : i1 to i32
    %c0_i32_9 = arith.constant 0 : i32
    %13 = arith.cmpi ne, %12, %c0_i32_9 : i32
    scf.if %13 {
      %cst_15 = arith.constant 0.000000e+00 : f32
      %20 = vector.broadcast %cst_15 : f32 to vector<8x128xf32>
      %c0_16 = arith.constant 0 : index
      %c0_17 = arith.constant 0 : index
      %21 = vector.load %arg7[%c0_16, %c0_17] : memref<8x128xf32, #tpu.memory_space<vmem>>, vector<8x128xf32>
      tpu.vector_store %arg7[%c0_16, %c0_17], %20 {strides = array<i32>} : memref<8x128xf32, #tpu.memory_space<vmem>>, vector<8x128xf32>,
    } else {
    }
    %14 = arith.mulf %9, %3 : vector<16x128xf32>
    %c0_10 = arith.constant 0 : index
    %c0_11 = arith.constant 0 : index
    %15 = vector.load %arg7[%c0_10, %c0_11] : memref<8x128xf32, #tpu.memory_space<vmem>>, vector<8x128xf32>
    %16 = vector.shape_cast %14 : vector<16x128xf32> to vector<2x8x128xf32>
    %cst_12 = arith.constant dense<0.000000e+00> : vector<8x128xf32>
    %17 = vector.multi_reduction <add>, %16, %cst_12 [0] : vector<2x8x128xf32> to vector<8x128xf32>
    %18 = arith.addf %15, %17 : vector<8x128xf32>
    %c0_13 = arith.constant 0 : index
    %c0_14 = arith.constant 0 : index
    %19 = vector.load %arg7[%c0_13, %c0_14] : memref<8x128xf32, #tpu.memory_space<vmem>>, vector<8x128xf32>
    tpu.vector_store %arg7[%c0_13, %c0_14], %18 {strides = array<i32>} : memref<8x128xf32, #tpu.memory_space<vmem>>, vector<8x128xf32>,
    return
  }
  func.func @transform_0(%arg0: i32, %arg1: i32) -> (i32, i32) {
    %c1_i32 = arith.constant 1 : i32
    %0 = arith.muli %arg0, %c1_i32 : i32
    %1 = arith.addi %0, %arg1 : i32
    %c0_i32 = arith.constant 0 : i32
    %c0_i32_0 = arith.constant 0 : i32
    return %1, %c0_i32 : i32, i32
  }
  func.func @transform_1(%arg0: i32, %arg1: i32) -> (i32, i32) {
    %c1_i32 = arith.constant 1 : i32
    %0 = arith.muli %arg0, %c1_i32 : i32
    %1 = arith.addi %0, %arg1 : i32
    %c0_i32 = arith.constant 0 : i32
    %c0_i32_0 = arith.constant 0 : i32
    return %1, %c0_i32 : i32, i32
  }
  func.func @transform_2(%arg0: i32, %arg1: i32) -> (i32, i32) {
    %c1_i32 = arith.constant 1 : i32
    %0 = arith.muli %arg0, %c1_i32 : i32
    %1 = arith.addi %0, %arg1 : i32
    %c0_i32 = arith.constant 0 : i32
    %c0_i32_0 = arith.constant 0 : i32
    return %1, %c0_i32 : i32, i32
  }
  func.func @transform_3(%arg0: i32, %arg1: i32) -> (i32, i32) {
    %c1_i32 = arith.constant 1 : i32
    %0 = arith.muli %arg0, %c1_i32 : i32
    %1 = arith.addi %0, %arg1 : i32
    %c0_i32 = arith.constant 0 : i32
    %c0_i32_0 = arith.constant 0 : i32
    return %1, %c0_i32 : i32, i32
  }
  func.func @transform_4(%arg0: i32, %arg1: i32) -> (i32, i32) {
    %c1_i32 = arith.constant 1 : i32
    %0 = arith.muli %arg0, %c1_i32 : i32
    %1 = arith.addi %0, %arg1 : i32
    %c0_i32 = arith.constant 0 : i32
    %c0_i32_0 = arith.constant 0 : i32
    return %1, %c0_i32 : i32, i32
  }
  func.func @transform_5(%arg0: i32, %arg1: i32) -> (i32, i32) {
    %c0_i32 = arith.constant 0 : i32
    %c0_i32_0 = arith.constant 0 : i32
    return %arg0, %c0_i32 : i32, i32
  }
}

</mosaic_0001>

<llo_original>
// kernel: tpu_custom_call.1
$region0: #{tpu_custom_call.1}
  #allocation0 [shape = 'u32[]', space=smem, size = 0x4, offset = 0x4, fixed_abs, tag = 'smem constant byte address 0x4 - core index']
  #allocation1 [shape = 'u32[72,128]{1,0:T(1,128)}', space=vmem, size = 0x9000, scoped, tag = 'internal scratch']
  %s0 = inlined_call_operand.vmem [shape: f32[32,128], index: 0, kind: input, shape index: {}]
  %s1 = inlined_call_operand.vmem [shape: f32[32,128], index: 1, kind: input, shape index: {}]
  %s2 = inlined_call_operand.hbm [shape: f32[32,128], index: 2, kind: input, shape index: {}]
  %s3 = inlined_call_operand.hbm [shape: f32[32,128], index: 3, kind: input, shape index: {}, may-alias: {3,4}]
  %s4 = inlined_call_operand.hbm [shape: f32[32,128], index: 4, kind: output, shape index: {0}, may-alias: {3,4}]
  %s5 = inlined_call_operand.hbm [shape: f32[16,128], index: 5, kind: output, shape index: {1}]
  %6 = xla_tuple %s4, %s5
  %s7 = sld [smem:[#allocation0]]
  $region69: #{tpu_custom_call.1} parent=0
    _
  %s9 = ssub.s32 1, %s7
  %s10 = scalar_select 0, %s9, %s7
  $region1: #{tpu_custom_call.1} parent=0
    #allocation2 [shape = 'u8[16384]{0}', space=vmem, size = 0x4000, scoped, tag = 'input window, operand 2']
    #allocation3 [shape = 's32[2]{0}', space=sflag, size = 0x8, scoped, tag = 'scoped memory for tpu_custom_call.1']
    #allocation4 [shape = 's32[2]{0}', space=sflag, size = 0x8, scoped, tag = 'scoped memory for tpu_custom_call.1']
    #allocation5 [shape = 'u8[16384]{0}', space=vmem, size = 0x4000, scoped, tag = 'input window, operand 3']
    #allocation6 [shape = 's32[2]{0}', space=sflag, size = 0x8, scoped, tag = 'scoped memory for tpu_custom_call.1']
    #allocation7 [shape = 'u8[16384]{0}', space=vmem, size = 0x4000, scoped, tag = 'output window, operand 0']
    #allocation8 [shape = 'u8[8192]{0}', space=vmem, size = 0x2000, scoped, tag = 'output window, operand 1']
    #allocation9 [shape = 's32[2]{0}', space=sflag, size = 0x8, scoped, tag = 'scoped memory for tpu_custom_call.1']
    %11 = vsyncpa [#allocation3], 0
    %s12 = scalar_lea.sflag [#allocation3], 1
    %13 = vsyncpa %s12, 0
    %14 = vsyncpa [#allocation6], 0
    %s15 = scalar_lea.sflag [#allocation6], 1
    %16 = vsyncpa %s15, 0
    %17 = vsyncpa [#allocation4], 0
    %s18 = scalar_lea.sflag [#allocation4], 1
    %19 = vsyncpa %s18, 0
    %20 = vsyncpa [#allocation9], 0
    %s21 = scalar_lea.sflag [#allocation9], 1
    %22 = vsyncpa %s21, 0
    loop: start=0, step=1, limit=4
    $region2: #{tpu_custom_call.1} parent=1 // loop_pre_header
      _
    $region3: #{tpu_custom_call.1} parent=1 // loop_header
      %s24 = sphi 0, %s28
      %p25 = scmp.ge.s32.totalorder %s24, 4
      %s31 = sphi 0, %s43
      %s32 = sphi 0, %s39
      %s33 = sphi 0, %s31
      %s34 = sphi 0, %s32
      %s35 = sphi 0, %s33
      %s36 = sphi 0, %s34
      %s48 = sphi 0, %s50
      %s51 = sphi 0, %s48
      %s52 = sphi 0, %s51
      %s68 = sphi 0, %s52
      %s76 = sphi 0, %s78
      %s79 = sphi 0, %s76
      %s80 = sphi 0, %s79
      %s96 = sphi 0, %s80
      %s104 = sphi 0, %s106
      %s107 = sphi 0, %s104
      %s108 = sphi 0, %s107
      %s124 = sphi 0, %s108
      %s132 = sphi 0, %s134
      %s135 = sphi 0, %s132
      %s136 = sphi 0, %s135
      %s152 = sphi 0, %s136
      %s160 = sphi 0, %s162
      %s163 = sphi 0, %s160
      %s164 = sphi 0, %s163
      %s180 = sphi 0, %s164
      %s186 = sphi 0, %s188
      %s189 = sphi 0, %s186
      %s190 = sphi 0, %s189
      %s206 = sphi 0, %s190
    $region4: #{tpu_custom_call.1} parent=1 // loop_header_branch
      %27 = sbr.rel (%p25) target = $region8
    $region5: #{tpu_custom_call.1} parent=1 // loop_body
      %s29 = ssub.s32 %s24, 1
      %s30 = ssub.s32 %s24, 2
      %s37 = sadd.s32 1, %s32
      %p38 = scmp.ge.s32.totalorder %s37, 1
      %s39 = scalar_select %p38, 0, %s37
      %s40 = sadd.s32 1, %s31
      %s41 = scalar_select %p38, %s40, %s31
      %p42 = scmp.ge.s32.totalorder %s41, 2
      %s43 = scalar_select %p42, 0, %s41
      %s44 = sadd.s32 %s31, %s32
      %s45 = sadd.s32 %s43, %s39
      %s46 = ssub.s32 %s44, %s45
      %p47 = scmp.eq.s32.totalorder %s46, 0
      %s49 = sadd.s32 %s48, 1
      %s50 = scalar_select %p47, %s48, %s49
      %p53 = pneg %p47
      %p54 = scmp.eq.s32.totalorder %s24, 1
      %p55 = por %p53, %p54
      %p56 = scmp.ne.s32.totalorder %s48, %s51
      %p57 = scmp.eq.s32.totalorder %s24, 0
      %p58 = por %p56, %p57
      %p59 = scmp.ne.s32.totalorder %s48, %s51
      %p60 = scmp.eq.s32.totalorder %s29, 1
      %p61 = por %p59, %p60
      %p62 = scmp.ne.s32.totalorder %s51, %s52
      %p63 = scmp.eq.s32.totalorder %s29, 0
      %p64 = por %p62, %p63
      %p65 = scmp.ne.s32.totalorder %s51, %s52
      %p66 = scmp.eq.s32.totalorder %s30, 1
      %p67 = por %p65, %p66
      %p69 = scmp.ne.s32.totalorder %s52, %s68
      %p70 = scmp.eq.s32.totalorder %s30, 0
      %p71 = por %p69, %p70
      %s72 = sadd.s32 %s31, %s32
      %s73 = sadd.s32 %s43, %s39
      %s74 = ssub.s32 %s72, %s73
      %p75 = scmp.eq.s32.totalorder %s74, 0
      %s77 = sadd.s32 %s76, 1
      %s78 = scalar_select %p75, %s76, %s77
      %p81 = pneg %p75
      %p82 = scmp.eq.s32.totalorder %s24, 1
      %p83 = por %p81, %p82
      %p84 = scmp.ne.s32.totalorder %s76, %s79
      %p85 = scmp.eq.s32.totalorder %s24, 0
      %p86 = por %p84, %p85
      %p87 = scmp.ne.s32.totalorder %s76, %s79
      %p88 = scmp.eq.s32.totalorder %s29, 1
      %p89 = por %p87, %p88
      %p90 = scmp.ne.s32.totalorder %s79, %s80
      %p91 = scmp.eq.s32.totalorder %s29, 0
      %p92 = por %p90, %p91
      %p93 = scmp.ne.s32.totalorder %s79, %s80
      %p94 = scmp.eq.s32.totalorder %s30, 1
      %p95 = por %p93, %p94
      %p97 = scmp.ne.s32.totalorder %s80, %s96
      %p98 = scmp.eq.s32.totalorder %s30, 0
      %p99 = por %p97, %p98
      %s100 = sadd.s32 %s31, %s32
      %s101 = sadd.s32 %s43, %s39
      %s102 = ssub.s32 %s100, %s101
      %p103 = scmp.eq.s32.totalorder %s102, 0
      %s105 = sadd.s32 %s104, 1
      %s106 = scalar_select %p103, %s104, %s105
      %p109 = pneg %p103
      %p110 = scmp.eq.s32.totalorder %s24, 1
      %p111 = por %p109, %p110
      %p112 = scmp.ne.s32.totalorder %s104, %s107
      %p113 = scmp.eq.s32.totalorder %s24, 0
      %p114 = por %p112, %p113
      %p115 = scmp.ne.s32.totalorder %s104, %s107
      %p116 = scmp.eq.s32.totalorder %s29, 1
      %p117 = por %p115, %p116
      %p118 = scmp.ne.s32.totalorder %s107, %s108
      %p119 = scmp.eq.s32.totalorder %s29, 0
      %p120 = por %p118, %p119
      %p121 = scmp.ne.s32.totalorder %s107, %s108
      %p122 = scmp.eq.s32.totalorder %s30, 1
      %p123 = por %p121, %p122
      %p125 = scmp.ne.s32.totalorder %s108, %s124
      %p126 = scmp.eq.s32.totalorder %s30, 0
      %p127 = por %p125, %p126
      %s128 = sadd.s32 %s31, %s32
      %s129 = sadd.s32 %s43, %s39
      %s130 = ssub.s32 %s128, %s129
      %p131 = scmp.eq.s32.totalorder %s130, 0
      %s133 = sadd.s32 %s132, 1
      %s134 = scalar_select %p131, %s132, %s133
      %p137 = pneg %p131
      %p138 = scmp.eq.s32.totalorder %s24, 1
      %p139 = por %p137, %p138
      %p140 = scmp.ne.s32.totalorder %s132, %s135
      %p141 = scmp.eq.s32.totalorder %s24, 0
      %p142 = por %p140, %p141
      %p143 = scmp.ne.s32.totalorder %s132, %s135
      %p144 = scmp.eq.s32.totalorder %s29, 1
      %p145 = por %p143, %p144
      %p146 = scmp.ne.s32.totalorder %s135, %s136
      %p147 = scmp.eq.s32.totalorder %s29, 0
      %p148 = por %p146, %p147
      %p149 = scmp.ne.s32.totalorder %s135, %s136
      %p150 = scmp.eq.s32.totalorder %s30, 1
      %p151 = por %p149, %p150
      %p153 = scmp.ne.s32.totalorder %s136, %s152
      %p154 = scmp.eq.s32.totalorder %s30, 0
      %p155 = por %p153, %p154
      %s156 = sadd.s32 %s31, %s32
      %s157 = sadd.s32 %s43, %s39
      %s158 = ssub.s32 %s156, %s157
      %p159 = scmp.eq.s32.totalorder %s158, 0
      %s161 = sadd.s32 %s160, 1
      %s162 = scalar_select %p159, %s160, %s161
      %p165 = pneg %p159
      %p166 = scmp.eq.s32.totalorder %s24, 1
      %p167 = por %p165, %p166
      %p168 = scmp.ne.s32.totalorder %s160, %s163
      %p169 = scmp.eq.s32.totalorder %s24, 0
      %p170 = por %p168, %p169
      %p171 = scmp.ne.s32.totalorder %s160, %s163
      %p172 = scmp.eq.s32.totalorder %s29, 1
      %p173 = por %p171, %p172
      %p174 = scmp.ne.s32.totalorder %s163, %s164
      %p175 = scmp.eq.s32.totalorder %s29, 0
      %p176 = por %p174, %p175
      %p177 = scmp.ne.s32.totalorder %s163, %s164
      %p178 = scmp.eq.s32.totalorder %s30, 1
      %p179 = por %p177, %p178
      %p181 = scmp.ne.s32.totalorder %s164, %s180
      %p182 = scmp.eq.s32.totalorder %s30, 0
      %p183 = por %p181, %p182
      %s184 = ssub.s32 %s31, %s43
      %p185 = scmp.eq.s32.totalorder %s184, 0
      %s187 = sadd.s32 %s186, 1
      %s188 = scalar_select %p185, %s186, %s187
      %p191 = pneg %p185
      %p192 = scmp.eq.s32.totalorder %s24, 1
      %p193 = por %p191, %p192
      %p194 = scmp.ne.s32.totalorder %s186, %s189
      %p195 = scmp.eq.s32.totalorder %s24, 0
      %p196 = por %p194, %p195
      %p197 = scmp.ne.s32.totalorder %s186, %s189
      %p198 = scmp.eq.s32.totalorder %s29, 1
      %p199 = por %p197, %p198
      %p200 = scmp.ne.s32.totalorder %s189, %s190
      %p201 = scmp.eq.s32.totalorder %s29, 0
      %p202 = por %p200, %p201
      %p203 = scmp.ne.s32.totalorder %s189, %s190
      %p204 = scmp.eq.s32.totalorder %s30, 1
      %p205 = por %p203, %p204
      %p207 = scmp.ne.s32.totalorder %s190, %s206
      %p208 = scmp.eq.s32.totalorder %s30, 0
      %p209 = por %p207, %p208
      %p210 = scmp.le.s32.totalorder 1, %s24
      %p211 = scmp.lt.s32.totalorder %s24, 3
      %p212 = pnand %p210, %p211
      %p213 = pneg %p212
      // Predicated region
      $region9: #{tpu_custom_call.1} parent=5 // pred_check
        _
      $region10: #{tpu_custom_call.1} parent=5 // pred_check_branch
        %215 = sbr.rel (%p212) target = $region12
      $region11: #{tpu_custom_call.1} parent=5 // pred_region
        %s216 = ssub.s32 %s24, 1
      $region12: #{tpu_custom_call.1} parent=5 // pred_fallthru
        _
      %p217 = scmp.lt.s32.totalorder %s24, 2
      // Predicated region
      $region13: #{tpu_custom_call.1} parent=5 // pred_check
        %p218 = pneg %p217
      $region14: #{tpu_custom_call.1} parent=5 // pred_check_branch
        %220 = sbr.rel (%p218) target = $region16
      $region15: #{tpu_custom_call.1} parent=5 // pred_region
        // Predicated region
        $region17: #{tpu_custom_call.1} parent=15 // pred_check
          %p221 = pneg %p58
        $region18: #{tpu_custom_call.1} parent=15 // pred_check_branch
          %223 = sbr.rel (%p221) target = $region20
        $region19: #{tpu_custom_call.1} parent=15 // pred_region
          %s224 = sadd.s32 %s31, %s32
          %s225 = smul.u32 2, %s224
          %p226 = scmp.lt.s32.totalorder %s225, 3
          %s227 = scalar_select %p226, %s225, 3
          %s228 = smul.addr %s227, 8
          %s229 = scalar_lea.vmem %s0, %s228
          %s230 = sadd.s32 %s31, %s32
          %s231 = smul.u32 2, %s230
        $region20: #{tpu_custom_call.1} parent=15 // pred_fallthru
          _
        // Predicated region
        $region21: #{tpu_custom_call.1} parent=15 // pred_check
          %p232 = pneg %p86
        $region22: #{tpu_custom_call.1} parent=15 // pred_check_branch
          %234 = sbr.rel (%p232) target = $region24
        $region23: #{tpu_custom_call.1} parent=15 // pred_region
          %s235 = sadd.s32 %s31, %s32
          %s236 = smul.u32 2, %s235
          %p237 = scmp.lt.s32.totalorder %s236, 3
          %s238 = scalar_select %p237, %s236, 3
          %s239 = smul.addr %s238, 8
          %s240 = scalar_lea.vmem %s1, %s239
          %s241 = sadd.s32 %s31, %s32
          %s242 = smul.u32 2, %s241
        $region24: #{tpu_custom_call.1} parent=15 // pred_fallthru
          _
        // Predicated region
        $region25: #{tpu_custom_call.1} parent=15 // pred_check
          %p243 = pneg %p114
        $region26: #{tpu_custom_call.1} parent=15 // pred_check_branch
          %245 = sbr.rel (%p243) target = $region28
        $region27: #{tpu_custom_call.1} parent=15 // pred_region
          %s246 = sand.u32 %s104, 1
          %s247 = scalar_lea.sflag [#allocation3], %s246
          %s248 = sand.u32 %s104, 1
          %s249 = smul.addr %s248, 16
          %s250 = scalar_lea.vmem [#allocation2], %s249
          %s251 = sadd.s32 %s31, %s32
          %s252 = smul.u32 2, %s251
          %254 = vsyncadd %s247, 0
          %s255 = smul.addr %s252, 8
          %s256 = scalar_lea.hbm %s2, %s255
          %s257 = sshll.u32 %s256, 4
          %s258 = int_to_ptr.hbm [resolvable:$true] %s257
          %s259 = sshll.u32 %s250, 4
          %s260 = int_to_ptr.vmem [resolvable:$true] %s259
          %265 = dma.hbm_to_vmem [thread:$0]  %s258, 256, %s260, %s247, 128, 128, 8
        $region28: #{tpu_custom_call.1} parent=15 // pred_fallthru
          _
        // Predicated region
        $region29: #{tpu_custom_call.1} parent=15 // pred_check
          %p266 = pneg %p142
        $region30: #{tpu_custom_call.1} parent=15 // pred_check_branch
          %268 = sbr.rel (%p266) target = $region32
        $region31: #{tpu_custom_call.1} parent=15 // pred_region
          %s269 = sand.u32 %s132, 1
          %s270 = scalar_lea.sflag [#allocation6], %s269
          %s271 = sand.u32 %s132, 1
          %s272 = smul.addr %s271, 16
          %s273 = scalar_lea.vmem [#allocation5], %s272
          %s274 = sadd.s32 %s31, %s32
          %s275 = smul.u32 2, %s274
          %277 = vsyncadd %s270, 0
          %s278 = smul.addr %s275, 8
          %s279 = scalar_lea.hbm %s3, %s278
          %s280 = sshll.u32 %s279, 4
          %s281 = int_to_ptr.hbm [resolvable:$true] %s280
          %s282 = sshll.u32 %s273, 4
          %s283 = int_to_ptr.vmem [resolvable:$true] %s282
          %288 = dma.hbm_to_vmem [thread:$0]  %s281, 256, %s283, %s270, 128, 128, 8
        $region32: #{tpu_custom_call.1} parent=15 // pred_fallthru
          _
      $region16: #{tpu_custom_call.1} parent=5 // pred_fallthru
        _
      %p289 = scmp.le.s32.totalorder 1, %s24
      %p290 = scmp.lt.s32.totalorder %s24, 3
      %p291 = pnand %p289, %p290
      %p292 = pneg %p291
      // Predicated region
      $region33: #{tpu_custom_call.1} parent=5 // pred_check
        _
      $region34: #{tpu_custom_call.1} parent=5 // pred_check_branch
        %294 = sbr.rel (%p291) target = $region36
      $region35: #{tpu_custom_call.1} parent=5 // pred_region
        %s295 = ssub.s32 %s24, 1
        %s296 = sand.u32 %s107, 1
        %s297 = scalar_lea.sflag [#allocation3], %s296
        %s298 = sand.u32 %s107, 1
        %s299 = smul.addr %s298, 16
        %s300 = scalar_lea.vmem [#allocation2], %s299
        // Predicated region
        $region37: #{tpu_custom_call.1} parent=35 // pred_check
          %p301 = pneg %p120
        $region38: #{tpu_custom_call.1} parent=35 // pred_check_branch
          %303 = sbr.rel (%p301) target = $region40
        $region39: #{tpu_custom_call.1} parent=35 // pred_region
          %305 = dma.done %s297, 256
        $region40: #{tpu_custom_call.1} parent=35 // pred_fallthru
          _
        %s306 = sand.u32 %s135, 1
        %s307 = scalar_lea.sflag [#allocation6], %s306
        %s308 = sand.u32 %s135, 1
        %s309 = smul.addr %s308, 16
        %s310 = scalar_lea.vmem [#allocation5], %s309
        // Predicated region
        $region41: #{tpu_custom_call.1} parent=35 // pred_check
          %p311 = pneg %p148
        $region42: #{tpu_custom_call.1} parent=35 // pred_check_branch
          %313 = sbr.rel (%p311) target = $region44
        $region43: #{tpu_custom_call.1} parent=35 // pred_region
          %315 = dma.done %s307, 256
        $region44: #{tpu_custom_call.1} parent=35 // pred_fallthru
          _
        %s316 = sadd.s32 %s33, %s34
        %s317 = smul.u32 2, %s316
        %p318 = scmp.lt.s32.totalorder %s317, 3
        %s319 = scalar_select %p318, %s317, 3
        %s320 = smul.addr %s319, 8
        %s321 = scalar_lea.vmem %s0, %s320
        %p322 = pneg %p64
        %p323 = pneg %p61
        %s324 = sadd.s32 %s33, %s34
        %s325 = smul.u32 2, %s324
        %p326 = scmp.lt.s32.totalorder %s325, 3
        %s327 = scalar_select %p326, %s325, 3
        %s328 = smul.addr %s327, 8
        %s329 = scalar_lea.vmem %s1, %s328
        %p330 = pneg %p92
        %p331 = pneg %p89
        %s332 = sand.u32 %s107, 1
        %s333 = scalar_lea.sflag [#allocation3], %s332
        %s334 = sand.u32 %s107, 1
        %s335 = smul.addr %s334, 16
        %s336 = scalar_lea.vmem [#allocation2], %s335
        %p337 = pneg %p120
        %p338 = pneg %p117
        %s339 = sand.u32 %s135, 1
        %s340 = scalar_lea.sflag [#allocation6], %s339
        %s341 = sand.u32 %s135, 1
        %s342 = smul.addr %s341, 16
        %s343 = scalar_lea.vmem [#allocation5], %s342
        %p344 = pneg %p148
        %p345 = pneg %p145
        %p346 = pneg %p176
        %p347 = pneg %p173
        %s348 = sand.u32 %s163, 1
        %s349 = scalar_lea.sflag [#allocation4], %s348
        %s350 = sand.u32 %s163, 1
        %s351 = smul.addr %s350, 16
        %s352 = scalar_lea.vmem [#allocation7], %s351
        %p353 = pneg %p202
        %p354 = pneg %p199
        %s355 = sand.u32 %s189, 1
        %s356 = scalar_lea.sflag [#allocation9], %s355
        %s357 = sand.u32 %s189, 1
        %s358 = smul.addr %s357, 8
        %s359 = scalar_lea.vmem [#allocation8], %s358
        %s360 = sadd.s32 %s33, %s34
        %s361 = smul.u32 2, %s360
        %p362 = scmp.lt.s32.totalorder %s361, 3
        %s363 = scalar_select %p362, %s361, 3
        %s364 = smul.addr %s363, 8
        %s365 = scalar_lea.vmem %s0, %s364
        %s366 = sadd.s32 %s33, %s34
        %s367 = smul.u32 2, %s366
        %s368 = sadd.s32 %s33, %s34
        %s369 = smul.u32 2, %s368
        %p370 = scmp.lt.s32.totalorder %s369, 3
        %s371 = scalar_select %p370, %s369, 3
        %s372 = smul.addr %s371, 8
        %s373 = scalar_lea.vmem %s1, %s372
        %s374 = sadd.s32 %s33, %s34
        %s375 = smul.u32 2, %s374
        %s376 = sadd.s32 %s33, %s34
        %s377 = smul.u32 2, %s376
        %s378 = sadd.s32 %s33, %s34
        %s379 = smul.u32 2, %s378
        %s380 = sadd.s32 %s33, %s34
        %s381 = smul.u32 2, %s380
        %v382 = vld [vmem:[%s373] sm:$0xff]
        %v383 = vld [vmem:[%s373 + $0x8] sm:$0xff]
        %v384 = vld [vmem:[%s300] sm:$0xff]
        %v385 = vld [vmem:[%s300 + $0x8] sm:$0xff]
        %v386 = vsub.f32 %v382, %v384
        %v387 = vsub.f32 %v383, %v385
        %v388 = vmul.f32 %v386, %v386
        %v389 = vmul.f32 %v387, %v387
        %v390 = vld [vmem:[%s310] sm:$0xff]
        %v391 = vld [vmem:[%s310 + $0x8] sm:$0xff]
        %v392 = vld [vmem:[%s365] sm:$0xff]
        %v393 = vld [vmem:[%s365 + $0x8] sm:$0xff]
        %v394 = vadd.f32 %v388, 0.1
        %v395 = vadd.f32 %v389, 0.1
        %v396 = vrcp.pop %v394
        %v397 = vmul.f32 %v394, %v396
        %v398 = vsub.f32 1.0, %v397
        %v399 = vmul.f32 %v396, %v398
        %v400 = vadd.f32 %v396, %v399
        %vm401 = vweird.f32 %v394
        %vm402 = vweird.f32 %v396
        %vm403 = vmor %vm401, %vm402
        %v404 = vsel %vm403, %v396, %v400
        %v405 = vand.u32 2147483647, %v394
        %vm406 = vcmp.eq.f32.partialorder %v405, 8.507059e+37
        %v407 = vand.u32 %v394, 2147483648
        %v408 = vor.u32 1.1754944e-38, %v407
        %v409 = vsel %vm406, %v408, %v404
        %v410 = vmul.f32 %v392, %v409
        %v411 = vrcp.pop %v395
        %v412 = vmul.f32 %v395, %v411
        %v413 = vsub.f32 1.0, %v412
        %v414 = vmul.f32 %v411, %v413
        %v415 = vadd.f32 %v411, %v414
        %vm416 = vweird.f32 %v395
        %vm417 = vweird.f32 %v411
        %vm418 = vmor %vm416, %vm417
        %v419 = vsel %vm418, %v411, %v415
        %v420 = vand.u32 2147483647, %v395
        %vm421 = vcmp.eq.f32.partialorder %v420, 8.507059e+37
        %v422 = vand.u32 %v395, 2147483648
        %v423 = vor.u32 1.1754944e-38, %v422
        %v424 = vsel %vm421, %v423, %v419
        %v425 = vmul.f32 %v393, %v424
        %v426 = vadd.f32 %v390, %v410
        %v427 = vadd.f32 %v391, %v425
        %428 = vst [vmem:[%s352] sm:$0xff] %v426
        %429 = vst [vmem:[%s352 + $0x8] sm:$0xff] %v427
        %p430 = scmp.eq.s32.totalorder %s34, 0
        // Predicated region
        $region45: #{tpu_custom_call.1} parent=35 // pred_check
          %p431 = pneg %p430
        $region46: #{tpu_custom_call.1} parent=35 // pred_check_branch
          %433 = sbr.rel (%p431) target = $region48
        $region47: #{tpu_custom_call.1} parent=35 // pred_region
          %434 = vst [vmem:[%s359] sm:$0xff] 0.0
        $region48: #{tpu_custom_call.1} parent=35 // pred_fallthru
          _
        %v435 = vmul.f32 %v426, %v388
        %v436 = vmul.f32 %v427, %v389
        %v437 = vld [vmem:[%s359] sm:$0xff]
        %v438 = vadd.f32 %v435, %v436
        %v439 = vadd.f32 %v437, %v438
        %440 = vst [vmem:[%s359] sm:$0xff] %v439
        %s441 = sand.u32 %s163, 1
        %s442 = scalar_lea.sflag [#allocation4], %s441
        %s443 = sand.u32 %s163, 1
        %s444 = smul.addr %s443, 16
        %s445 = scalar_lea.vmem [#allocation7], %s444
        %s446 = sand.u32 %s189, 1
        %s447 = scalar_lea.sflag [#allocation9], %s446
        %s448 = sand.u32 %s189, 1
        %s449 = smul.addr %s448, 8
        %s450 = scalar_lea.vmem [#allocation8], %s449
        // Predicated region
        $region49: #{tpu_custom_call.1} parent=35 // pred_check
          %p451 = pneg %p173
        $region50: #{tpu_custom_call.1} parent=35 // pred_check_branch
          %453 = sbr.rel (%p451) target = $region52
        $region51: #{tpu_custom_call.1} parent=35 // pred_region
          %s454 = sadd.s32 %s33, %s34
          %s455 = smul.u32 2, %s454
          %457 = vsyncadd %s442, 0
          %s458 = smul.addr %s455, 8
          %s459 = scalar_lea.hbm %s4, %s458
          %s460 = sshll.u32 %s445, 4
          %s461 = int_to_ptr.vmem [resolvable:$true] %s460
          %s462 = sshll.u32 %s459, 4
          %s463 = int_to_ptr.hbm [resolvable:$true] %s462
          %468 = dma.vmem_to_hbm [thread:$0]  %s461, 256, %s463, %s442, 128, 128, 8
        $region52: #{tpu_custom_call.1} parent=35 // pred_fallthru
          _
        // Predicated region
        $region53: #{tpu_custom_call.1} parent=35 // pred_check
          %p469 = pneg %p199
        $region54: #{tpu_custom_call.1} parent=35 // pred_check_branch
          %471 = sbr.rel (%p469) target = $region56
        $region55: #{tpu_custom_call.1} parent=35 // pred_region
          %473 = vsyncadd %s447, 0
          %s474 = smul.addr %s33, 8
          %s475 = scalar_lea.hbm %s5, %s474
          %s477 = sshll.u32 %s450, 4
          %s478 = int_to_ptr.vmem [resolvable:$true] %s477
          %s479 = sshll.u32 %s475, 4
          %s480 = int_to_ptr.hbm [resolvable:$true] %s479
          %482 = dma.vmem_to_hbm [thread:$0]  %s478, 128, %s480, %s447
        $region56: #{tpu_custom_call.1} parent=35 // pred_fallthru
          _
      $region36: #{tpu_custom_call.1} parent=5 // pred_fallthru
        _
      %p483 = scmp.le.s32.totalorder 2, %s24
      // Predicated region
      $region57: #{tpu_custom_call.1} parent=5 // pred_check
        %p484 = pneg %p483
      $region58: #{tpu_custom_call.1} parent=5 // pred_check_branch
        %486 = sbr.rel (%p484) target = $region60
      $region59: #{tpu_custom_call.1} parent=5 // pred_region
        %s487 = ssub.s32 %s24, 2
        // Predicated region
        $region61: #{tpu_custom_call.1} parent=59 // pred_check
          %p488 = pneg %p179
        $region62: #{tpu_custom_call.1} parent=59 // pred_check_branch
          %490 = sbr.rel (%p488) target = $region64
        $region63: #{tpu_custom_call.1} parent=59 // pred_region
          %s491 = sand.u32 %s164, 1
          %s492 = scalar_lea.sflag [#allocation4], %s491
          %s493 = sand.u32 %s164, 1
          %s494 = smul.addr %s493, 16
          %s495 = scalar_lea.vmem [#allocation7], %s494
          %497 = dma.done %s492, 256
        $region64: #{tpu_custom_call.1} parent=59 // pred_fallthru
          _
        // Predicated region
        $region65: #{tpu_custom_call.1} parent=59 // pred_check
          %p498 = pneg %p205
        $region66: #{tpu_custom_call.1} parent=59 // pred_check_branch
          %500 = sbr.rel (%p498) target = $region68
        $region67: #{tpu_custom_call.1} parent=59 // pred_region
          %s501 = sand.u32 %s190, 1
          %s502 = scalar_lea.sflag [#allocation9], %s501
          %s503 = sand.u32 %s190, 1
          %s504 = smul.addr %s503, 8
          %s505 = scalar_lea.vmem [#allocation8], %s504
          %507 = dma.done %s502, 128
        $region68: #{tpu_custom_call.1} parent=59 // pred_fallthru
          _
      $region60: #{tpu_custom_call.1} parent=5 // pred_fallthru
        _
    $region6: #{tpu_custom_call.1} parent=1 // loop_footer
      %s28 = sadd.s32 1, %s24
    $region7: #{tpu_custom_call.1} parent=1 // loop_footer_branch
      %23 = sbr.rel target = $region3
    $region8: #{tpu_custom_call.1} parent=1 // loop_exit
      _
    %508 = vsyncpa [#allocation3], 1
    %s509 = scalar_lea.sflag [#allocation3], 1
    %510 = vsyncpa %s509, 1
    %511 = vsyncpa [#allocation6], 1
    %s512 = scalar_lea.sflag [#allocation6], 1
    %513 = vsyncpa %s512, 1
    %514 = vsyncpa [#allocation4], 1
    %s515 = scalar_lea.sflag [#allocation4], 1
    %516 = vsyncpa %s515, 1
    %517 = vsyncpa [#allocation9], 1
    %s518 = scalar_lea.sflag [#allocation9], 1
    %519 = vsyncpa %s518, 1

</llo_original>
